<compile_context>
chip_gen: v5e
topology: v5e:2x2
jax: 0.10.0
libtpu: 0.0.40
codegen_flags: <defaults>
</compile_context>

<pallas_src>
import jax
import jax.numpy as jnp
from jax.experimental import pallas as pl
from jax.experimental.pallas import tpu as pltpu

_LANES = 1024          # lane-dense tile width (multiple of 128)
_ROWS_PER_TILE = 256   # sublane tile height; 256x1024 int32 block = 1 MiB/step


def _make_mask_kernel(pad_ids):
    """Build a kernel with the pad ids baked in as constants (static per vocab)."""
    pad_ids = tuple(int(p) for p in pad_ids)

    def kernel(x_ref, mask_ref):
        x = x_ref[...]                       # (rows_per_tile, lanes) int32
        keep = x != pad_ids[0]               # bool vregs, no int widening
        for pid in pad_ids[1:]:              # static unroll (<= 2 more cmp+and)
            keep = keep & (x != pid)
        mask_ref[...] = keep.astype(mask_ref.dtype)   # uint8 store, lane-dense

    return kernel


def _choose_layout(n):
    """Pick a lane-dense (rows, lanes) layout + tiling for n flat elements."""
    lanes = _LANES if n >= _LANES else 128 * pl.cdiv(n, 128)
    rows_needed = pl.cdiv(n, lanes)
    if rows_needed <= _ROWS_PER_TILE:
        # single tile; round rows up to a multiple of 8 for friendly sublane tiling
        rows_per_tile = max(8, 8 * pl.cdiv(rows_needed, 8))
        rows_padded = rows_per_tile
        n_tiles = 1
    else:
        rows_per_tile = _ROWS_PER_TILE
        n_tiles = pl.cdiv(rows_needed, rows_per_tile)
        rows_padded = n_tiles * rows_per_tile
    return lanes, rows_per_tile, rows_padded, n_tiles


def get_mask(tokens, pad_ids):
    """tokens: integer array of any shape. pad_ids: python list of pad token ids
    (already filtered: present in vocab and != unk_id).  Returns uint8 mask of
    the same shape (1 = keep, 0 = padding), matching the torch reference."""
    orig_shape = tokens.shape
    pad_ids = [int(p) for p in pad_ids]
    if not pad_ids:
        return jnp.ones(orig_shape, dtype=jnp.uint8)

    n = 1
    for d in orig_shape:
        n *= int(d)

    flat = tokens.reshape(-1).astype(jnp.int32)
    lanes, rows_per_tile, rows_padded, n_tiles = _choose_layout(n)

    n_padded = rows_padded * lanes
    if n_padded != n:
        flat = jnp.pad(flat, (0, n_padded - n))  # padded tail is sliced off below
    x2d = flat.reshape(rows_padded, lanes)

    mask2d = pl.pallas_call(
        _make_mask_kernel(pad_ids),
        out_shape=jax.ShapeDtypeStruct((rows_padded, lanes), jnp.uint8),
        grid=(n_tiles,),
        in_specs=[pl.BlockSpec((rows_per_tile, lanes), lambda i: (i, 0))],
        out_specs=pl.BlockSpec((rows_per_tile, lanes), lambda i: (i, 0)),
        compiler_params=pltpu.CompilerParams(
            dimension_semantics=("parallel",)),   # lets v7x shard across 2 TCs
    )(x2d)

    if n_padded != n:
        return mask2d.reshape(-1)[:n].reshape(orig_shape)
    return mask2d.reshape(orig_shape)


class PallasModel:
    """JAX/Pallas re-implementation of the base `Model`'s get_mask path."""

    def __init__(self, vocabs, opt):
        self.vocabs = vocabs
        self.opt = opt

    def get_mask(self, batch, output):
        side = output
        input_tensor = getattr(batch, side)
        if isinstance(input_tensor, tuple) and len(input_tensor) == 2:
            input_tensor, _lengths = input_tensor
        possible_padding = [self.opt.PAD, self.opt.START, self.opt.STOP]
        unk_id = self.vocabs[side].stoi.get(self.opt.UNK)
        pad_ids = []
        for pad in possible_padding:
            pad_id = self.vocabs[side].stoi.get(pad)
            if pad_id is not None and pad_id != unk_id:
                pad_ids.append(pad_id)
        return get_mask(input_tensor, pad_ids)

    def forward(self, *args, **kwargs):
        # TODO(synk): base-class forward is `pass` in the reference module; nothing to compute.
        return None


# -------------------- tiny deterministic test harness --------------------

class _Vocab:
    def __init__(self, stoi):
        self.stoi = stoi


class _Opt:
    PAD = "<pad>"
    START = "<s>"
    STOP = "</s>"
    UNK = "<unk>"


class _Batch:
    pass


def _reference_mask(tokens, pad_ids):
    m = jnp.ones_like(tokens, dtype=jnp.uint8)
    for pid in pad_ids:
        m = m & (tokens != pid).astype(jnp.uint8)
    return m


if __name__ == "__main__":
    key = jax.random.PRNGKey(0)
    k_small, k_big = jax.random.split(key)

    # deterministic vocab: pad=0, start=1, stop=2, unk=3
    stoi = {"<pad>": 0, "<s>": 1, "</s>": 2, "<unk>": 3}
    vocabs = {"target": _Vocab(stoi)}
    opt = _Opt()
    model = PallasModel(vocabs, opt)

    # small, module-consistent shape: batch=2, seq=8
    B, S, VOCAB = 2, 8, 32
    tokens = jax.random.randint(k_small, (B, S), minval=0, maxval=VOCAB,
                                dtype=jnp.int32)
    batch = _Batch()
    batch.target = tokens
    mask = jax.block_until_ready(model.get_mask(batch, "target"))
    ref = _reference_mask(tokens, [0, 1, 2])
    assert mask.dtype == jnp.uint8
    assert mask.shape == (B, S)
    assert bool(jnp.all(mask == ref)), "small mask mismatch vs reference"

    # secondary check: exercises the multi-tile (pipelined) path
    tokens_big = jax.random.randint(k_big, (512, 1024), minval=0, maxval=VOCAB,
                                    dtype=jnp.int32)
    batch_big = _Batch()
    batch_big.target = (tokens_big, None)  # also exercise the (tensor, lengths) path
    mask_big = jax.block_until_ready(model.get_mask(batch_big, "target"))
    ref_big = _reference_mask(tokens_big, [0, 1, 2])
    assert mask_big.dtype == jnp.uint8
    assert mask_big.shape == tokens_big.shape
    assert bool(jnp.all(mask_big == ref_big)), "tiled mask mismatch vs reference"

    print("KERNEL_OK")
</pallas_src>

<mosaic_0001>
module attributes {stable_mosaic.version = 11 : i64} {
  func.func @kernel(%arg0: i32, %arg1: memref<8x128xi32, #tpu.memory_space<vmem>>, %arg2: memref<8x128xi8, #tpu.memory_space<vmem>>) attributes {dimension_semantics = [#tpu.dimension_semantics<parallel>], iteration_bounds = array<i64: 1>, scalar_prefetch = 0 : i64, scratch_operands = 0 : i64, tpu.core_type = #tpu.core_type<tc>, window_params = [{transform_indices = @transform_0, window_bounds = array<i64: 8, 128>}, {transform_indices = @transform_1, window_bounds = array<i64: 8, 128>}]} {
    %c0 = arith.constant 0 : index
    %c0_0 = arith.constant 0 : index
    %0 = vector.load %arg1[%c0, %c0_0] : memref<8x128xi32, #tpu.memory_space<vmem>>, vector<8x128xi32>
    %c0_i32 = arith.constant 0 : i32
    %1 = vector.broadcast %c0_i32 : i32 to vector<8x128xi32>
    %2 = arith.cmpi ne, %0, %1 : vector<8x128xi32>
    %c1_i32 = arith.constant 1 : i32
    %3 = vector.broadcast %c1_i32 : i32 to vector<8x128xi32>
    %4 = arith.cmpi ne, %0, %3 : vector<8x128xi32>
    %5 = arith.andi %2, %4 : vector<8x128xi1>
    %c2_i32 = arith.constant 2 : i32
    %6 = vector.broadcast %c2_i32 : i32 to vector<8x128xi32>
    %7 = arith.cmpi ne, %0, %6 : vector<8x128xi32>
    %8 = arith.andi %5, %7 : vector<8x128xi1>
    %9 = arith.extui %8 : vector<8x128xi1> to vector<8x128xi8>
    %c0_1 = arith.constant 0 : index
    %c0_2 = arith.constant 0 : index
    %10 = vector.load %arg2[%c0_1, %c0_2] : memref<8x128xi8, #tpu.memory_space<vmem>>, vector<8x128xi8>
    tpu.vector_store %arg2[%c0_1, %c0_2], %9 {strides = array<i32>} : memref<8x128xi8, #tpu.memory_space<vmem>>, vector<8x128xi8>,
    return
  }
  func.func @transform_0(%arg0: i32) -> (i32, i32) {
    %c0_i32 = arith.constant 0 : i32
    %c0_i32_0 = arith.constant 0 : i32
    return %arg0, %c0_i32 : i32, i32
  }
  func.func @transform_1(%arg0: i32) -> (i32, i32) {
    %c0_i32 = arith.constant 0 : i32
    %c0_i32_0 = arith.constant 0 : i32
    return %arg0, %c0_i32 : i32, i32
  }
}

</mosaic_0001>

<llo_original>
// kernel: tpu_custom_call.1
$region0: #{tpu_custom_call.1}
  #allocation0 [shape = 'u32[]', space=smem, size = 0x4, offset = 0x4, fixed_abs, tag = 'smem constant byte address 0x4 - core index']
  #allocation1 [shape = 'u32[72,128]{1,0:T(1,128)}', space=vmem, size = 0x9000, scoped, tag = 'internal scratch']
  %s0 = inlined_call_operand.hbm [shape: s32[8,128], index: 0, kind: input, shape index: {}]
  %s1 = inlined_call_operand.hbm [shape: u8[8,128], index: 1, kind: output, shape index: {}]
  %s2 = sld [smem:[#allocation0]]
  $region18: #{tpu_custom_call.1} parent=0
    _
  %s4 = ssub.s32 1, %s2
  %s5 = scalar_select 0, %s4, %s2
  $region1: #{tpu_custom_call.1} parent=0
    #allocation2 [shape = 'u8[4096]{0}', space=vmem, size = 0x1000, scoped, tag = 'input window, operand 0, single buffered']
    #allocation3 [shape = 's32[1]{0}', space=sflag, size = 0x4, scoped, tag = 'scoped memory for tpu_custom_call.1']
    #allocation4 [shape = 's32[1]{0}', space=sflag, size = 0x4, scoped, tag = 'scoped memory for tpu_custom_call.1']
    #allocation5 [shape = 'u8[1024]{0}', space=vmem, size = 0x400, scoped, tag = 'output window, operand 0, single buffered']
    %6 = vsyncpa [#allocation3], 0
    %7 = vsyncpa [#allocation4], 0
    // Predicated region
    $region2: #{tpu_custom_call.1} parent=1 // pred_check
      _
    $region3: #{tpu_custom_call.1} parent=1 // pred_check_branch
      %9 = sbr.rel (0) target = $region5
    $region4: #{tpu_custom_call.1} parent=1 // pred_region
      %11 = vsyncadd [#allocation3], 0
      %s13 = sshll.u32 %s0, 4
      %s14 = int_to_ptr.hbm [resolvable:$true] %s13
      %s15 = sshll.u32 [#allocation2], 4
      %s16 = int_to_ptr.vmem [resolvable:$true] %s15
      %18 = dma.hbm_to_vmem [thread:$0]  %s14, 128, %s16, [#allocation3]
    $region5: #{tpu_custom_call.1} parent=1 // pred_fallthru
      _
    // Predicated region
    $region6: #{tpu_custom_call.1} parent=1 // pred_check
      _
    $region7: #{tpu_custom_call.1} parent=1 // pred_check_branch
      %20 = sbr.rel (0) target = $region9
    $region8: #{tpu_custom_call.1} parent=1 // pred_region
      %22 = dma.done [#allocation3], 128
    $region9: #{tpu_custom_call.1} parent=1 // pred_fallthru
      _
    %v25 = vld [vmem:[#allocation2] sm:$0xff]
    %vm26 = vcmp.ne.s32.totalorder %v25, 0
    %vm27 = vcmp.ne.s32.totalorder %v25, 1
    %vm28 = vmand %vm26, %vm27
    %vm29 = vcmp.ne.s32.totalorder %v25, 2
    %vm30 = vmand %vm28, %vm29
    %vm31 = vmpackc.low %vm30, %vm30
    %v32 = vsel %vm31, 16711935, 0
    %v33 = vsel %vm31, 16711935, 0
    %v34 = vpack.c.b8 %v33, %v32
    %vm35 = vnez %v34
    %v36 = vsel %vm35, 16843009, 0
    %37 = vst [vmem:[#allocation5] sm:$0x3] %v36
    // Predicated region
    $region10: #{tpu_custom_call.1} parent=1 // pred_check
      _
    $region11: #{tpu_custom_call.1} parent=1 // pred_check_branch
      %39 = sbr.rel (0) target = $region13
    $region12: #{tpu_custom_call.1} parent=1 // pred_region
      %41 = vsyncadd [#allocation4], 0
      %s43 = sshll.u32 [#allocation5], 4
      %s44 = int_to_ptr.vmem [resolvable:$true] %s43
      %s45 = sshll.u32 %s1, 4
      %s46 = int_to_ptr.hbm [resolvable:$true] %s45
      %48 = dma.vmem_to_hbm [thread:$0]  %s44, 32, %s46, [#allocation4]
    $region13: #{tpu_custom_call.1} parent=1 // pred_fallthru
      _
    // Predicated region
    $region14: #{tpu_custom_call.1} parent=1 // pred_check
      _
    $region15: #{tpu_custom_call.1} parent=1 // pred_check_branch
      %50 = sbr.rel (0) target = $region17
    $region16: #{tpu_custom_call.1} parent=1 // pred_region
      %52 = dma.done [#allocation4], 32
    $region17: #{tpu_custom_call.1} parent=1 // pred_fallthru
      _
    %53 = vsyncpa [#allocation3], 1
    %54 = vsyncpa [#allocation4], 1

</llo_original>
